<compile_context>
chip_gen: v6e
topology: v6e:2x2x1
jax: 0.10.0
libtpu: 0.0.40
codegen_flags: <defaults>
</compile_context>

<pallas_src>
import jax
import jax.numpy as jnp
from jax.experimental import pallas as pl
from jax.experimental.pallas import tpu as pltpu


def _round_up(x, m):
    return (x + m - 1) // m * m


def _cdiv(a, b):
    return (a + b - 1) // b


def mlp_kernel(x_ref, w1_ref, b1_ref, w2_ref, b2_ref, o_ref):
    # In-kernel bf16 cast of the activation tile (VPU op) -> x is read from HBM once as f32.
    x = x_ref[...].astype(jnp.bfloat16)
    # fc1: (tm, D)bf16 @ (D, Hp)bf16 -> f32 accumulate; bias add + ReLU stay in f32.
    h = jnp.dot(x, w1_ref[...], preferred_element_type=jnp.float32)
    h = jnp.maximum(h + b1_ref[...], 0.0)
    # Dropout(p=0.5): identity in eval/inference mode (PyTorch only masks+scales in training).
    # TODO(synk): training-mode dropout would use pltpu.prng_seed + pltpu.prng_random_bits mask.
    # fc2: cast activations back to bf16 for the MXU, accumulate in f32, add bias in f32.
    out = jnp.dot(h.astype(w2_ref.dtype), w2_ref[...],
                  preferred_element_type=jnp.float32)
    o_ref[...] = (out + b2_ref[...]).astype(o_ref.dtype)


def prepare_params(w1, b1, w2, b2):
    """One-time parameter prep (call once, reuse for every forward).

    w1: (H, D), b1: (H,)   -- PyTorch nn.Linear layout
    w2: (C, H), b2: (C,)
    Returns lane-friendly, pre-transposed bf16 weights + f32 biases:
      w1t: (D, Hp) bf16, b1p: (1, Hp) f32, w2t: (Hp, C) bf16, b2p: (1, C) f32
    Hidden axis is padded to 128 lanes (zeros -> ReLU(0+0)=0 -> zero rows of w2t: exact).
    """
    H, D = w1.shape
    C = w2.shape[0]
    Hp = _round_up(H, 128)
    w1t = jnp.zeros((D, Hp), jnp.bfloat16).at[:, :H].set(w1.T.astype(jnp.bfloat16))
    b1p = jnp.zeros((1, Hp), jnp.float32).at[0, :H].set(b1.reshape(-1).astype(jnp.float32))
    w2t = jnp.zeros((Hp, C), jnp.bfloat16).at[:H, :].set(w2.T.astype(jnp.bfloat16))
    b2p = b2.reshape(1, C).astype(jnp.float32)
    return w1t, b1p, w2t, b2p


def net_forward(x, w1t, b1p, w2t, b2p, *, tm=512):
    """Forward pass of Net. x: (B, D) f32; params from prepare_params()."""
    B, D = x.shape
    Dw, Hp = w1t.shape
    Hp2, C = w2t.shape
    assert Dw == D and Hp2 == Hp

    # Sublane-align the batch only (pad to 8, never to tm); tm forced to a multiple of 8.
    Bp = _round_up(B, 8)
    tm = _round_up(max(8, min(tm, Bp)), 8)
    # Give v7x's two TensorCores at least 2 grid steps to shard over when the batch allows
    # (no-op cost on single-TC v5e/v6e beyond one ~0.35us grid step).
    if Bp >= 16:
        tm = min(tm, _round_up(_cdiv(Bp, 2), 8))
    grid = (_cdiv(Bp, tm),)

    xp = x if Bp == B else jnp.pad(x, ((0, Bp - B), (0, 0)))

    out = pl.pallas_call(
        mlp_kernel,
        out_shape=jax.ShapeDtypeStruct((Bp, C), x.dtype),
        grid=grid,
        in_specs=[
            pl.BlockSpec((tm, D), lambda i: (i, 0)),    # x: tiled over batch, D = full extent
            pl.BlockSpec((D, Hp), lambda i: (0, 0)),    # w1^T: VMEM-resident across iters
            pl.BlockSpec((1, Hp), lambda i: (0, 0)),    # b1
            pl.BlockSpec((Hp, C), lambda i: (0, 0)),    # w2^T
            pl.BlockSpec((1, C), lambda i: (0, 0)),     # b2
        ],
        out_specs=pl.BlockSpec((tm, C), lambda i: (i, 0)),  # (Bp, C): no 128-lane write slab
        compiler_params=pltpu.CompilerParams(
            dimension_semantics=("parallel",),          # batch axis shards across TCs (v7x)
        ),
    )(xp, w1t, b1p, w2t, b2p)

    # Drop the (at most 7) sublane-padding rows; fuses away under jit.
    return out[:B]


def init_linear(key, out_features, in_features):
    # Mirror PyTorch nn.Linear default init: U(-1/sqrt(fan_in), 1/sqrt(fan_in))
    kw, kb = jax.random.split(key)
    bound = 1.0 / jnp.sqrt(jnp.float32(in_features))
    w = jax.random.uniform(kw, (out_features, in_features), jnp.float32, -bound, bound)
    b = jax.random.uniform(kb, (out_features,), jnp.float32, -bound, bound)
    return w, b


if __name__ == "__main__":
    key = jax.random.PRNGKey(0)
    kx, k1, k2 = jax.random.split(key, 3)

    batch = 2
    in_dim = 32
    hidden = in_dim // 2   # 16
    num_classes = 10

    x = jax.random.normal(kx, (batch, in_dim), jnp.float32)
    w1, b1 = init_linear(k1, hidden, in_dim)
    w2, b2 = init_linear(k2, num_classes, hidden)

    # One-time parameter preparation (hoisted out of the per-call forward).
    params = prepare_params(w1, b1, w2, b2)

    fwd = jax.jit(net_forward)
    out = jax.block_until_ready(fwd(x, *params))

    # Pure-JAX f32 reference (eval-mode dropout = identity). Tolerance covers the bf16
    # MXU path (bf16 mantissa ~2^-8 relative per operand).
    ref = jnp.maximum(x @ w1.T + b1, 0.0) @ w2.T + b2
    assert out.shape == (batch, num_classes)
    assert out.dtype == x.dtype
    assert jnp.allclose(out, ref, atol=3e-2, rtol=3e-2), float(jnp.max(jnp.abs(out - ref)))

    print("KERNEL_OK")
</pallas_src>

<mosaic_0001>
module attributes {stable_mosaic.version = 11 : i64} {
  func.func @mlp_kernel(%arg0: i32, %arg1: memref<8x32xf32, #tpu.memory_space<vmem>>, %arg2: memref<32x128xbf16, #tpu.memory_space<vmem>>, %arg3: memref<1x128xf32, #tpu.memory_space<vmem>>, %arg4: memref<128x10xbf16, #tpu.memory_space<vmem>>, %arg5: memref<1x10xf32, #tpu.memory_space<vmem>>, %arg6: memref<8x10xf32, #tpu.memory_space<vmem>>) attributes {dimension_semantics = [#tpu.dimension_semantics<parallel>], iteration_bounds = array<i64: 1>, scalar_prefetch = 0 : i64, scratch_operands = 0 : i64, tpu.core_type = #tpu.core_type<tc>, window_params = [{transform_indices = @transform_0, window_bounds = array<i64: 8, 32>}, {pipeline_mode = #tpu.pipeline_mode<synchronous>, transform_indices = @transform_1, window_bounds = array<i64: 32, 128>}, {pipeline_mode = #tpu.pipeline_mode<synchronous>, transform_indices = @transform_2, window_bounds = array<i64: 1, 128>}, {pipeline_mode = #tpu.pipeline_mode<synchronous>, transform_indices = @transform_3, window_bounds = array<i64: 128, 10>}, {pipeline_mode = #tpu.pipeline_mode<synchronous>, transform_indices = @transform_4, window_bounds = array<i64: 1, 10>}, {transform_indices = @transform_5, window_bounds = array<i64: 8, 10>}]} {
    %c0 = arith.constant 0 : index
    %c0_0 = arith.constant 0 : index
    %0 = vector.load %arg1[%c0, %c0_0] : memref<8x32xf32, #tpu.memory_space<vmem>>, vector<8x32xf32>
    %1 = arith.truncf %0 : vector<8x32xf32> to vector<8x32xbf16>
    %c0_1 = arith.constant 0 : index
    %c0_2 = arith.constant 0 : index
    %2 = vector.load %arg2[%c0_1, %c0_2] : memref<32x128xbf16, #tpu.memory_space<vmem>>, vector<32x128xbf16>
    %cst = arith.constant dense<0.000000e+00> : vector<8x128xf32>
    %3 = tpu.matmul %1, %2, %cst {dimension_numbers = #tpu.dot_dimension_numbers<[1], [0], [0], [1], [0, 0, 1, 1], [], []>} : vector<8x32xbf16>, vector<32x128xbf16>, vector<8x128xf32> -> vector<8x128xf32>
    %c0_3 = arith.constant 0 : index
    %c0_4 = arith.constant 0 : index
    %4 = vector.load %arg3[%c0_3, %c0_4] : memref<1x128xf32, #tpu.memory_space<vmem>>, vector<1x128xf32>
    %5 = vector.broadcast %4 : vector<1x128xf32> to vector<8x128xf32>
    %6 = arith.addf %3, %5 : vector<8x128xf32>
    %cst_5 = arith.constant 0.000000e+00 : f32
    %7 = vector.broadcast %cst_5 : f32 to vector<8x128xf32>
    %8 = arith.maximumf %6, %7 : vector<8x128xf32>
    %9 = arith.truncf %8 : vector<8x128xf32> to vector<8x128xbf16>
    %c0_6 = arith.constant 0 : index
    %c0_7 = arith.constant 0 : index
    %10 = vector.load %arg4[%c0_6, %c0_7] : memref<128x10xbf16, #tpu.memory_space<vmem>>, vector<128x10xbf16>
    %cst_8 = arith.constant dense<0.000000e+00> : vector<8x10xf32>
    %11 = tpu.matmul %9, %10, %cst_8 {dimension_numbers = #tpu.dot_dimension_numbers<[1], [0], [0], [1], [0, 0, 1, 1], [], []>} : vector<8x128xbf16>, vector<128x10xbf16>, vector<8x10xf32> -> vector<8x10xf32>
    %c0_9 = arith.constant 0 : index
    %c0_10 = arith.constant 0 : index
    %12 = vector.load %arg5[%c0_9, %c0_10] : memref<1x10xf32, #tpu.memory_space<vmem>>, vector<1x10xf32>
    %13 = vector.broadcast %12 : vector<1x10xf32> to vector<8x10xf32>
    %14 = arith.addf %11, %13 : vector<8x10xf32>
    %c0_11 = arith.constant 0 : index
    %c0_12 = arith.constant 0 : index
    %15 = vector.load %arg6[%c0_11, %c0_12] : memref<8x10xf32, #tpu.memory_space<vmem>>, vector<8x10xf32>
    tpu.vector_store %arg6[%c0_11, %c0_12], %14 {strides = array<i32>} : memref<8x10xf32, #tpu.memory_space<vmem>>, vector<8x10xf32>,
    return
  }
  func.func @transform_0(%arg0: i32) -> (i32, i32) {
    %c0_i32 = arith.constant 0 : i32
    %c0_i32_0 = arith.constant 0 : i32
    return %arg0, %c0_i32 : i32, i32
  }
  func.func @transform_1(%arg0: i32) -> (i32, i32) {
    %c0_i32 = arith.constant 0 : i32
    %c0_i32_0 = arith.constant 0 : i32
    %c0_i32_1 = arith.constant 0 : i32
    return %c0_i32, %c0_i32_0 : i32, i32
  }
  func.func @transform_2(%arg0: i32) -> (i32, i32) {
    %c0_i32 = arith.constant 0 : i32
    %c0_i32_0 = arith.constant 0 : i32
    %c0_i32_1 = arith.constant 0 : i32
    return %c0_i32, %c0_i32_0 : i32, i32
  }
  func.func @transform_3(%arg0: i32) -> (i32, i32) {
    %c0_i32 = arith.constant 0 : i32
    %c0_i32_0 = arith.constant 0 : i32
    %c0_i32_1 = arith.constant 0 : i32
    return %c0_i32, %c0_i32_0 : i32, i32
  }
  func.func @transform_4(%arg0: i32) -> (i32, i32) {
    %c0_i32 = arith.constant 0 : i32
    %c0_i32_0 = arith.constant 0 : i32
    %c0_i32_1 = arith.constant 0 : i32
    return %c0_i32, %c0_i32_0 : i32, i32
  }
  func.func @transform_5(%arg0: i32) -> (i32, i32) {
    %c0_i32 = arith.constant 0 : i32
    %c0_i32_0 = arith.constant 0 : i32
    return %arg0, %c0_i32 : i32, i32
  }
}

</mosaic_0001>

<llo_original>
// kernel: net_forward.1
$region0: #{net_forward.1}
  #allocation0 [shape = 'u32[]', space=smem, size = 0x4, offset = 0x4, fixed_abs, tag = 'smem constant byte address 0x4 - core index']
  #allocation1 [shape = 'u32[144,128]{1,0:T(1,128)}', space=vmem, size = 0x12000, scoped, tag = 'internal scratch']
  %s0 = inlined_call_operand.vmem [shape: f32[8,32], index: 0, kind: input, shape index: {}]
  %s1 = inlined_call_operand.vmem [shape: bf16[32,128], index: 1, kind: input, shape index: {}]
  %s2 = inlined_call_operand.vmem [shape: f32[1,128], index: 2, kind: input, shape index: {}]
  %s3 = inlined_call_operand.vmem [shape: bf16[128,10], index: 3, kind: input, shape index: {}]
  %s4 = inlined_call_operand.vmem [shape: f32[1,10], index: 4, kind: input, shape index: {}]
  %s5 = inlined_call_operand.vmem [shape: f32[8,10], index: 5, kind: output, shape index: {}]
  %s6 = sld [smem:[#allocation0]]
  $region30: #{net_forward.1} parent=0
    _
  %s8 = ssub.s32 1, %s6
  %s9 = scalar_select 0, %s8, %s6
  // Predicated region
  $region2: #{net_forward.1} parent=0 // pred_check
    _
  $region3: #{net_forward.1} parent=0 // pred_check_branch
    %11 = sbr.rel (0) target = $region5
  $region4: #{net_forward.1} parent=0 // pred_region
    _
  $region5: #{net_forward.1} parent=0 // pred_fallthru
    _
  // Predicated region
  $region6: #{net_forward.1} parent=0 // pred_check
    _
  $region7: #{net_forward.1} parent=0 // pred_check_branch
    %13 = sbr.rel (0) target = $region9
  $region8: #{net_forward.1} parent=0 // pred_region
    _
  $region9: #{net_forward.1} parent=0 // pred_fallthru
    _
  // Predicated region
  $region10: #{net_forward.1} parent=0 // pred_check
    _
  $region11: #{net_forward.1} parent=0 // pred_check_branch
    %15 = sbr.rel (0) target = $region13
  $region12: #{net_forward.1} parent=0 // pred_region
    _
  $region13: #{net_forward.1} parent=0 // pred_fallthru
    _
  // Predicated region
  $region14: #{net_forward.1} parent=0 // pred_check
    _
  $region15: #{net_forward.1} parent=0 // pred_check_branch
    %17 = sbr.rel (0) target = $region17
  $region16: #{net_forward.1} parent=0 // pred_region
    _
  $region17: #{net_forward.1} parent=0 // pred_fallthru
    _
  // Predicated region
  $region18: #{net_forward.1} parent=0 // pred_check
    _
  $region19: #{net_forward.1} parent=0 // pred_check_branch
    %19 = sbr.rel (0) target = $region21
  $region20: #{net_forward.1} parent=0 // pred_region
    _
  $region21: #{net_forward.1} parent=0 // pred_fallthru
    _
  %v21 = vld [vmem:[%s0] sm:$0xff]
  %v22 = vpack.c.bf16 %v21, %v21
  %v23 = vld [vmem:[%s1] sm:$0xf]
  %v24 = vld [vmem:[%s1 + $0x4] sm:$0xf]
  %v25 = vld [vmem:[%s1 + $0x8] sm:$0xf]
  %v26 = vld [vmem:[%s1 + $0xc] sm:$0xf]
  %v27 = vld [vmem:[%s2] sm:$0x1]
  %v29 = vlaneseq
  %v30 = vshrl.u32 %v29, 7
  %v31 = vsub.s32 0, %v30
  %v32 = vrot.slane %v27, %v31
  %v38 = vunpack.c.l.b16 %v23
  %v39 = vunpack.c.l.b16 %v24
  %v40 = vunpack.c.l.b16 %v25
  %v41 = vunpack.c.l.b16 %v26
  %v42 = vpack.c.b16 %v39, %v38
  %v43 = vpack.c.b16 %v41, %v40
  %vm46 = vcmask 261120
  %v48 = vsel %vm46, %v22, 0
  %50 = vmatprep.subr.bf16.mxu0 0
  %51 = vmatpush1.bf16.msra.mxu0 0
  %52 = vmatprep.subr.bf16.mxu0 0
  %53 = vmatpush1.bf16.msra.mxu0 0
  %54 = vmatprep.subr.bf16.mxu0 0
  %55 = vmatpush1.bf16.msra.mxu0 0
  %56 = vmatprep.subr.bf16.mxu0 0
  %57 = vmatpush1.bf16.msra.mxu0 0
  %58 = vmatprep.subr.bf16.mxu0 0
  %59 = vmatpush1.bf16.msra.mxu0 0
  %60 = vmatprep.subr.bf16.mxu0 0
  %61 = vmatpush1.bf16.msra.mxu0 0
  %62 = vmatprep.subr.bf16.mxu0 0
  %63 = vmatpush1.bf16.msra.mxu0 %v43
  %64 = vmatprep.subr.bf16.mxu0 0
  %65 = vmatpush1.bf16.msra.mxu0 %v42
  %66 = vmatprep.subr.bf16.mxu0 0
  %67 = vmatpush2.bf16.msra.mxu0 0
  %68 = vmatprep.subr.bf16.mxu0 0
  %69 = vmatpush2.bf16.msra.mxu0 0
  %70 = vmatprep.subr.bf16.mxu0 0
  %71 = vmatpush2.bf16.msra.mxu0 0
  %72 = vmatprep.subr.bf16.mxu0 0
  %73 = vmatpush2.bf16.msra.mxu0 0
  %74 = vmatprep.subr.bf16.mxu0 0
  %75 = vmatpush2.bf16.msra.mxu0 0
  %76 = vmatprep.subr.bf16.mxu0 0
  %77 = vmatpush2.bf16.msra.mxu0 0
  %78 = vmatprep.subr.bf16.mxu0 0
  %79 = vmatpush2.bf16.msra.mxu0 0
  %80 = vmatprep.subr.bf16.mxu0 0
  %81 = vmatpush2.bf16.msra.mxu0 0
  %82 = vmatprep.mubr.bf16.mxu0 0
  %83 = vmatmul.mubr.bf16.gmra.mxu0 %v48
  %v84 = vpop.f32.mrf.mxu0
  %v85 = vadd.f32 %v32, %v84
  %v86 = vpop.f32.mrf.mxu0
  %v87 = vpop.f32.mrf.mxu0
  %v88 = vpop.f32.mrf.mxu0
  %89 = vdwg.mxu0
  %v90 = vmax.f32 %v85, 0.0
  %v91 = vpack.c.bf16 %v90, %v90
  %v92 = vld [vmem:[%s3] sm:$0xf]
  %v93 = vld [vmem:[%s3 + $0x4] sm:$0xf]
  %v94 = vld [vmem:[%s3 + $0x8] sm:$0xf]
  %v95 = vld [vmem:[%s3 + $0xc] sm:$0xf]
  %v96 = vld [vmem:[%s3 + $0x10] sm:$0xf]
  %v97 = vld [vmem:[%s3 + $0x14] sm:$0xf]
  %v98 = vld [vmem:[%s3 + $0x18] sm:$0xf]
  %v99 = vld [vmem:[%s3 + $0x1c] sm:$0xf]
  %v100 = vld [vmem:[%s3 + $0x20] sm:$0xf]
  %v101 = vld [vmem:[%s3 + $0x24] sm:$0xf]
  %v102 = vld [vmem:[%s3 + $0x28] sm:$0xf]
  %v103 = vld [vmem:[%s3 + $0x2c] sm:$0xf]
  %v104 = vld [vmem:[%s3 + $0x30] sm:$0xf]
  %v105 = vld [vmem:[%s3 + $0x34] sm:$0xf]
  %v106 = vld [vmem:[%s3 + $0x38] sm:$0xf]
  %v107 = vld [vmem:[%s3 + $0x3c] sm:$0xf]
  %v108 = vld [vmem:[%s4] sm:$0x1]
  %v110 = vlaneseq
  %v111 = vshrl.u32 %v110, 7
  %v112 = vsub.s32 0, %v111
  %v113 = vrot.slane %v108, %v112
  %v131 = vunpack.c.l.b16 %v92
  %v132 = vunpack.c.l.b16 %v93
  %v133 = vunpack.c.l.b16 %v94
  %v134 = vunpack.c.l.b16 %v95
  %v135 = vunpack.c.l.b16 %v96
  %v136 = vunpack.c.l.b16 %v97
  %v137 = vunpack.c.l.b16 %v98
  %v138 = vunpack.c.l.b16 %v99
  %v139 = vunpack.c.l.b16 %v100
  %v140 = vunpack.c.l.b16 %v101
  %v141 = vunpack.c.l.b16 %v102
  %v142 = vunpack.c.l.b16 %v103
  %v143 = vunpack.c.l.b16 %v104
  %v144 = vunpack.c.l.b16 %v105
  %v145 = vunpack.c.l.b16 %v106
  %v146 = vunpack.c.l.b16 %v107
  %v147 = vpack.c.b16 %v132, %v131
  %v148 = vpack.c.b16 %v134, %v133
  %v149 = vpack.c.b16 %v136, %v135
  %v150 = vpack.c.b16 %v138, %v137
  %v151 = vpack.c.b16 %v140, %v139
  %v152 = vpack.c.b16 %v142, %v141
  %v153 = vpack.c.b16 %v144, %v143
  %v154 = vpack.c.b16 %v146, %v145
  %163 = vmatprep.subr.bf16.mxu0 0
  %164 = vmatpush1.bf16.msra.mxu0 %v154
  %165 = vmatprep.subr.bf16.mxu0 0
  %166 = vmatpush1.bf16.msra.mxu0 %v153
  %167 = vmatprep.subr.bf16.mxu0 0
  %168 = vmatpush1.bf16.msra.mxu0 %v152
  %169 = vmatprep.subr.bf16.mxu0 0
  %170 = vmatpush1.bf16.msra.mxu0 %v151
  %171 = vmatprep.subr.bf16.mxu0 0
  %172 = vmatpush1.bf16.msra.mxu0 %v150
  %173 = vmatprep.subr.bf16.mxu0 0
  %174 = vmatpush1.bf16.msra.mxu0 %v149
  %175 = vmatprep.subr.bf16.mxu0 0
  %176 = vmatpush1.bf16.msra.mxu0 %v148
  %177 = vmatprep.subr.bf16.mxu0 0
  %178 = vmatpush1.bf16.msra.mxu0 %v147
  %179 = vmatprep.subr.bf16.mxu0 0
  %180 = vmatpush2.bf16.msra.mxu0 0
  %181 = vmatprep.subr.bf16.mxu0 0
  %182 = vmatpush2.bf16.msra.mxu0 0
  %183 = vmatprep.subr.bf16.mxu0 0
  %184 = vmatpush2.bf16.msra.mxu0 0
  %185 = vmatprep.subr.bf16.mxu0 0
  %186 = vmatpush2.bf16.msra.mxu0 0
  %187 = vmatprep.subr.bf16.mxu0 0
  %188 = vmatpush2.bf16.msra.mxu0 0
  %189 = vmatprep.subr.bf16.mxu0 0
  %190 = vmatpush2.bf16.msra.mxu0 0
  %191 = vmatprep.subr.bf16.mxu0 0
  %192 = vmatpush2.bf16.msra.mxu0 0
  %193 = vmatprep.subr.bf16.mxu0 0
  %194 = vmatpush2.bf16.msra.mxu0 0
  %195 = vmatprep.mubr.bf16.mxu0 0
  %196 = vmatmul.mubr.bf16.gmra.mxu0 %v91
  %v197 = vpop.f32.mrf.mxu0
  %v198 = vadd.f32 %v113, %v197
  %v199 = vpop.f32.mrf.mxu0
  %v200 = vpop.f32.mrf.mxu0
  %v201 = vpop.f32.mrf.mxu0
  %202 = vdwg.mxu0
  %vm203 = vcmask 80896
  %204 = vst.msk [vmem:[%s5] sm:$0xff] %vm203, %v198
  // Predicated region
  $region22: #{net_forward.1} parent=0 // pred_check
    _
  $region23: #{net_forward.1} parent=0 // pred_check_branch
    %206 = sbr.rel (0) target = $region25
  $region24: #{net_forward.1} parent=0 // pred_region
    _
  $region25: #{net_forward.1} parent=0 // pred_fallthru
    _
  // Predicated region
  $region26: #{net_forward.1} parent=0 // pred_check
    _
  $region27: #{net_forward.1} parent=0 // pred_check_branch
    %208 = sbr.rel (0) target = $region29
  $region28: #{net_forward.1} parent=0 // pred_region
    _
  $region29: #{net_forward.1} parent=0 // pred_fallthru
    _

</llo_original>
